<compile_context>
chip_gen: v6e
topology: v6e:2x2x1
jax: 0.10.0
libtpu: 0.0.40
codegen_flags: <defaults>
</compile_context>

<pallas_src>
import jax
import jax.numpy as jnp
from jax.experimental import pallas as pl
from jax.experimental.pallas import tpu as pltpu


def _linear_kernel(xt_ref, w_ref, b_ref, o_ref):
    # xt_ref: (F, TB) VMEM  -- batch in lanes, features in sublanes
    # w_ref : (F, 1)  VMEM  -- broadcast over lanes
    # b_ref : (1, 1)  SMEM  -- scalar bias
    # o_ref : (1, TB) VMEM  -- lane-dense output row
    prod = xt_ref[...].astype(jnp.float32) * w_ref[...].astype(jnp.float32)  # VPU
    acc = jnp.sum(prod, axis=0, keepdims=True)                               # XLU
    o_ref[...] = (acc + b_ref[0, 0]).astype(o_ref.dtype)


def _pick_batch_tile(batch, max_tile=2048):
    """Largest lane-aligned tile that evenly divides batch; else one full tile."""
    for cand in (2048, 1024, 512, 256, 128):
        if cand <= max_tile and cand <= batch and batch % cand == 0:
            return cand
    return batch  # full-array block (always legal), single tile


def stock_predictor_forward(x, weight, bias):
    """Pallas equivalent of StockPredictor.forward.

    Args:
      x:      (batch, input_size) float32
      weight: (1, input_size)     float32  (PyTorch nn.Linear layout)
      bias:   (1,)                float32
    Returns:
      (batch, 1) float32
    """
    batch, input_size = x.shape
    xt = x.T                                  # (F, B): batch -> lane dimension
    w_col = weight.reshape(input_size, 1)     # (F, 1): broadcast over lanes
    b_s = bias.reshape(1, 1)                  # scalar, lives in SMEM

    tb = _pick_batch_tile(batch)
    num_tiles = batch // tb

    if num_tiles == 1:
        # Small / single-tile path: no grid, no pipeline bookkeeping.
        out = pl.pallas_call(
            _linear_kernel,
            out_shape=jax.ShapeDtypeStruct((1, batch), x.dtype),
            in_specs=[
                pl.BlockSpec(memory_space=pltpu.MemorySpace.VMEM),
                pl.BlockSpec(memory_space=pltpu.MemorySpace.VMEM),
                pl.BlockSpec(memory_space=pltpu.MemorySpace.SMEM),
            ],
            out_specs=pl.BlockSpec(memory_space=pltpu.MemorySpace.VMEM),
        )(xt, w_col, b_s)
    else:
        # Batched path: pipelined stream over batch tiles, weight stays resident.
        out = pl.pallas_call(
            _linear_kernel,
            out_shape=jax.ShapeDtypeStruct((1, batch), x.dtype),
            grid=(num_tiles,),
            in_specs=[
                pl.BlockSpec((input_size, tb), lambda i: (0, i)),
                pl.BlockSpec((input_size, 1), lambda i: (0, 0)),
                pl.BlockSpec(memory_space=pltpu.MemorySpace.SMEM),
            ],
            out_specs=pl.BlockSpec((1, tb), lambda i: (0, i)),
            compiler_params=pltpu.CompilerParams(
                dimension_semantics=("parallel",),
            ),
        )(xt, w_col, b_s)

    return out.reshape(batch, 1)


if __name__ == "__main__":
    # Small shapes consistent with the module: batch=8, input_size=32.
    batch, input_size = 8, 32

    key = jax.random.PRNGKey(0)
    kx, kw, kb = jax.random.split(key, 3)

    x = jax.random.normal(kx, (batch, input_size), dtype=jnp.float32)

    # Deterministic init mimicking nn.Linear's uniform(-1/sqrt(in), 1/sqrt(in)).
    bound = 1.0 / (input_size ** 0.5)
    weight = jax.random.uniform(kw, (1, input_size), minval=-bound, maxval=bound,
                                dtype=jnp.float32)
    bias = jax.random.uniform(kb, (1,), minval=-bound, maxval=bound,
                              dtype=jnp.float32)

    y = stock_predictor_forward(x, weight, bias)
    jax.block_until_ready(y)

    # Sanity check against a plain-JAX reference of the PyTorch semantics.
    y_ref = x @ weight.T + bias
    assert y.shape == (batch, 1)
    assert jnp.allclose(y, y_ref, atol=1e-5, rtol=1e-5)

    # Exercise the tiled (grid) path as well with a larger, lane-aligned batch.
    big_batch = 512
    xb = jax.random.normal(kx, (big_batch, input_size), dtype=jnp.float32)
    yb = stock_predictor_forward(xb, weight, bias)
    jax.block_until_ready(yb)
    yb_ref = xb @ weight.T + bias
    assert yb.shape == (big_batch, 1)
    assert jnp.allclose(yb, yb_ref, atol=1e-5, rtol=1e-5)

    print("KERNEL_OK")
</pallas_src>

<mosaic_0001>
module attributes {stable_mosaic.version = 11 : i64} {
  func.func @_linear_kernel(%arg0: memref<32x8xf32, #tpu.memory_space<vmem>>, %arg1: memref<32x1xf32, #tpu.memory_space<vmem>>, %arg2: memref<1x1xf32, #tpu.memory_space<smem>>, %arg3: memref<1x8xf32, #tpu.memory_space<vmem>>) attributes {dimension_semantics = [], scalar_prefetch = 0 : i64, scratch_operands = 0 : i64, tpu.core_type = #tpu.core_type<tc>} {
    %c0 = arith.constant 0 : index
    %c0_0 = arith.constant 0 : index
    %0 = vector.load %arg0[%c0, %c0_0] : memref<32x8xf32, #tpu.memory_space<vmem>>, vector<32x8xf32>
    %c0_1 = arith.constant 0 : index
    %c0_2 = arith.constant 0 : index
    %1 = vector.load %arg1[%c0_1, %c0_2] : memref<32x1xf32, #tpu.memory_space<vmem>>, vector<32x1xf32>
    %2 = vector.broadcast %1 : vector<32x1xf32> to vector<32x8xf32>
    %3 = arith.mulf %0, %2 : vector<32x8xf32>
    %cst = arith.constant dense<0.000000e+00> : vector<8xf32>
    %4 = vector.multi_reduction <add>, %3, %cst [0] : vector<32x8xf32> to vector<8xf32>
    %5 = vector.shape_cast %4 : vector<8xf32> to vector<1x8xf32>
    %c0_3 = arith.constant 0 : index
    %c0_4 = arith.constant 0 : index
    %6 = memref.load %arg2[%c0_3, %c0_4] : memref<1x1xf32, #tpu.memory_space<smem>>
    %7 = vector.broadcast %6 : f32 to vector<1x8xf32>
    %8 = arith.addf %5, %7 : vector<1x8xf32>
    %c0_5 = arith.constant 0 : index
    %c0_6 = arith.constant 0 : index
    %9 = vector.load %arg3[%c0_5, %c0_6] : memref<1x8xf32, #tpu.memory_space<vmem>>, vector<1x8xf32>
    tpu.vector_store %arg3[%c0_5, %c0_6], %8 {strides = array<i32>} : memref<1x8xf32, #tpu.memory_space<vmem>>, vector<1x8xf32>,
    return
  }
}

</mosaic_0001>

<llo_original>
// kernel: tpu_custom_call.1
$region0: #{tpu_custom_call.1}
  #allocation0 [shape = 'u32[]', space=smem, size = 0x4, offset = 0x4, fixed_abs, tag = 'smem constant byte address 0x4 - core index']
  #allocation1 [shape = 'u32[144,128]{1,0:T(1,128)}', space=vmem, size = 0x12000, scoped, tag = 'internal scratch']
  #allocation2 [shape = 'f32[1,1]{1,0:T(1,128)S(6)}', space=smem, size = 0x200, scoped, tag = 'scoped memory for tpu_custom_call.1']
  %s0 = inlined_call_operand.vmem [shape: f32[32,8], index: 0, kind: input, shape index: {}]
  %s1 = inlined_call_operand.vmem [shape: f32[32,1], index: 1, kind: input, shape index: {}]
  %s2 = inlined_call_operand.<no memory space> [shape: f32[1,1], index: 2, kind: input, shape index: {}]
  %s3 = inlined_call_operand.hbm [shape: f32[1,8], index: 3, kind: output, shape index: {}]
  %s4 = sld [smem:[#allocation0]]
  $region22: #{tpu_custom_call.1} parent=0
    _
  %s6 = ssub.s32 1, %s4
  %s7 = scalar_select 0, %s6, %s4
  %8 = sst [smem:[#allocation2]] %s2
  $region1: #{tpu_custom_call.1} parent=0
    #allocation3 [shape = 'u8[512]{0}', space=vmem, size = 0x400, scoped, tag = 'output window, operand 0, single buffered']
    #allocation4 [shape = 's32[1]{0}', space=sflag, size = 0x4, scoped, tag = 'scoped memory for tpu_custom_call.1']
    %9 = vsyncpa [#allocation4], 0
    // Predicated region
    $region2: #{tpu_custom_call.1} parent=1 // pred_check
      _
    $region3: #{tpu_custom_call.1} parent=1 // pred_check_branch
      %11 = sbr.rel (0) target = $region5
    $region4: #{tpu_custom_call.1} parent=1 // pred_region
      _
    $region5: #{tpu_custom_call.1} parent=1 // pred_fallthru
      _
    // Predicated region
    $region6: #{tpu_custom_call.1} parent=1 // pred_check
      _
    $region7: #{tpu_custom_call.1} parent=1 // pred_check_branch
      %13 = sbr.rel (0) target = $region9
    $region8: #{tpu_custom_call.1} parent=1 // pred_region
      _
    $region9: #{tpu_custom_call.1} parent=1 // pred_fallthru
      _
    // Predicated region
    $region10: #{tpu_custom_call.1} parent=1 // pred_check
      _
    $region11: #{tpu_custom_call.1} parent=1 // pred_check_branch
      %15 = sbr.rel (0) target = $region13
    $region12: #{tpu_custom_call.1} parent=1 // pred_region
      _
    $region13: #{tpu_custom_call.1} parent=1 // pred_fallthru
      _
    %v16 = vld [vmem:[%s0] sm:$0xff]
    %v17 = vld [vmem:[%s0 + $0x8] sm:$0xff]
    %v18 = vld [vmem:[%s0 + $0x10] sm:$0xff]
    %v19 = vld [vmem:[%s0 + $0x18] sm:$0xff]
    %v20 = vld [vmem:[%s1] sm:$0xff]
    %v21 = vld [vmem:[%s1 + $0x8] sm:$0xff]
    %v22 = vld [vmem:[%s1 + $0x10] sm:$0xff]
    %v23 = vld [vmem:[%s1 + $0x18] sm:$0xff]
    %25 = vset.pattern.permute.xlu0 0
    %26 = vperm.xlu0 %25, %v20
    %v27 = vpop.permute.xlu0 %26
    %30 = vset.pattern.permute.xlu0 0
    %31 = vperm.xlu0 %30, %v21
    %v32 = vpop.permute.xlu0 %31
    %35 = vset.pattern.permute.xlu0 0
    %36 = vperm.xlu0 %35, %v22
    %v37 = vpop.permute.xlu0 %36
    %40 = vset.pattern.permute.xlu0 0
    %41 = vperm.xlu0 %40, %v23
    %v42 = vpop.permute.xlu0 %41
    %v44 = vmul.f32 %v16, %v27
    %v45 = vmul.f32 %v17, %v32
    %v46 = vmul.f32 %v18, %v37
    %v47 = vmul.f32 %v19, %v42
    %vm48 = vcmask 64512
    %v49 = vsel %vm48, %v44, 0.0
    %v50 = vsel %vm48, %v45, 0.0
    %v51 = vadd.f32 %v49, %v50
    %v52 = vsel %vm48, %v46, 0.0
    %v53 = vadd.f32 %v51, %v52
    %v54 = vsel %vm48, %v47, 0.0
    %v55 = vadd.f32 %v53, %v54
    %v56 = vrot.slane %v55, 4
    %v57 = vadd.f32 %v55, %v56
    %v58 = vrot.slane %v57, 2
    %v59 = vadd.f32 %v57, %v58
    %v60 = vrot.slane %v59, 1
    %v61 = vadd.f32 %v59, %v60
    %s62 = sld [smem:[#allocation2]]
    %v63 = vstv %s62
    %v64 = vadd.f32 %v61, %v63
    %vm65 = vcmask 57344
    %66 = vst.msk [vmem:[#allocation3] sm:$0x1] %vm65, %v64
    // Predicated region
    $region14: #{tpu_custom_call.1} parent=1 // pred_check
      _
    $region15: #{tpu_custom_call.1} parent=1 // pred_check_branch
      %68 = sbr.rel (0) target = $region17
    $region16: #{tpu_custom_call.1} parent=1 // pred_region
      %s70 = ssub.s32 16, 16
      %71 = vsyncadd [#allocation4], %s70
      %s73 = sshll.u32 [#allocation3], 4
      %s74 = int_to_ptr.vmem [resolvable:$true] %s73
      %76 = dma.vmem_to_hbm [thread:$0]  %s74, 16, %s3, [#allocation4]
    $region17: #{tpu_custom_call.1} parent=1 // pred_fallthru
      _
    // Predicated region
    $region18: #{tpu_custom_call.1} parent=1 // pred_check
      _
    $region19: #{tpu_custom_call.1} parent=1 // pred_check_branch
      %78 = sbr.rel (0) target = $region21
    $region20: #{tpu_custom_call.1} parent=1 // pred_region
      %79 = dma.done [#allocation4], 16
    $region21: #{tpu_custom_call.1} parent=1 // pred_fallthru
      _
    %80 = vsyncpa [#allocation4], 1

</llo_original>
